<compile_context>
chip_gen: v7x
topology: tpu7x:2x2x1
jax: 0.10.0
libtpu: 0.0.40
codegen_flags: <defaults>
</compile_context>

<pallas_src>
import math
from typing import NamedTuple

import jax
import jax.numpy as jnp
from jax import lax
from jax.experimental import pallas as pl
from jax.experimental.pallas import tpu as pltpu

_MIB = 1024 * 1024


def _round_up(x, m):
    return ((x + m - 1) // m) * m


def _physical_vmem_bytes():
    """Best-effort per-core VMEM query; falls back to the v7x 64 MiB floor."""
    try:
        info = pltpu.get_tpu_info()
        for attr in ("vmem_capacity_bytes", "vmem_bytes", "vmem_size_bytes"):
            v = getattr(info, attr, None)
            if v:
                return int(v)
    except Exception:
        pass
    return 64 * _MIB


class PreparedMlpParams(NamedTuple):
    w1: jax.Array   # (in_p, hid_p)   transposed vs. torch, lane-padded to 128
    b1: jax.Array   # (1, hid_p)
    w2: jax.Array   # (hid_p, out_p)
    b2: jax.Array   # (1, out_p)
    in_features: int
    out_features: int


def _pad2d(a, rows, cols):
    pr, pc = rows - a.shape[0], cols - a.shape[1]
    if pr or pc:
        a = jnp.pad(a, ((0, pr), (0, pc)))
    return a


def prepare_mlp_params(w1, b1, w2, b2, compute_dtype=None):
    """One-time parameter prep (hoisted out of the per-call path).

    Pads every feature dim to a multiple of 128 (lane-dense) and optionally casts
    the parameters to `compute_dtype` (e.g. bf16 for full-rate MXU feed).  Zero
    padding is numerically exact: GELU(0) = 0 and padded w2 rows are zero, so the
    padded hidden columns contribute nothing.
    """
    in_f, hid = w1.shape
    out_f = w2.shape[1]
    in_p, hid_p, out_p = (_round_up(d, 128) for d in (in_f, hid, out_f))
    if compute_dtype is not None:
        w1, b1, w2, b2 = (a.astype(compute_dtype) for a in (w1, b1, w2, b2))
    return PreparedMlpParams(
        w1=_pad2d(w1, in_p, hid_p),
        b1=_pad2d(b1.reshape(1, hid), 1, hid_p),
        w2=_pad2d(w2, hid_p, out_p),
        b2=_pad2d(b2.reshape(1, out_f), 1, out_p),
        in_features=in_f,
        out_features=out_f,
    )


def _make_mlp_kernel(tk, accumulate_in_output, approx_gelu):
    inv_sqrt2 = 1.0 / math.sqrt(2.0)

    def _act(h):
        if approx_gelu:
            return jax.nn.gelu(h, approximate=True)          # tanh path (EUP slot)
        return 0.5 * h * (1.0 + lax.erf(h * inv_sqrt2))       # nn.GELU default (exact)

    def _fc2_partial(x_ref, w1_ref, b1_ref, w2_ref):
        k = pl.program_id(1)
        # fc1 tile: native-dtype MXU operands, f32 accumulation.
        h = jnp.dot(x_ref[...], w1_ref[...], preferred_element_type=jnp.float32)
        b1 = b1_ref[:, pl.ds(pl.multiple_of(k * tk, 128), tk)]
        h = _act(h + b1.astype(jnp.float32))
        # TODO(synk): Dropout(p>0) would need pltpu.prng_* masking; p=0.0 is the identity.
        return jnp.dot(h.astype(w2_ref.dtype), w2_ref[...],
                       preferred_element_type=jnp.float32)

    if accumulate_in_output:
        # f32 output: accumulate directly into the resident output block (no scratch).
        def kernel(x_ref, w1_ref, b1_ref, w2_ref, b2_ref, o_ref):
            k = pl.program_id(1)
            p = _fc2_partial(x_ref, w1_ref, b1_ref, w2_ref)

            @pl.when(k == 0)
            def _():
                o_ref[...] = p            # first partial writes directly (no memset)

            @pl.when(k != 0)
            def _():
                o_ref[...] += p

            @pl.when(k == pl.num_programs(1) - 1)
            def _():
                o_ref[...] += b2_ref[...].astype(jnp.float32)

        return kernel

    # Non-f32 output: f32 VMEM accumulator, cast on the final store.
    def kernel(x_ref, w1_ref, b1_ref, w2_ref, b2_ref, o_ref, acc_ref):
        k = pl.program_id(1)
        p = _fc2_partial(x_ref, w1_ref, b1_ref, w2_ref)

        @pl.when(k == 0)
        def _():
            acc_ref[...] = p              # first partial writes directly (no memset)

        @pl.when(k != 0)
        def _():
            acc_ref[...] += p

        @pl.when(k == pl.num_programs(1) - 1)
        def _():
            o_ref[...] = (acc_ref[...] + b2_ref[...].astype(jnp.float32)).astype(o_ref.dtype)

    return kernel


def _select_tiles(M, in_p, hid_p, out_p, compute_itemsize, out_itemsize,
                  tm_req, tk_req, use_scratch, vmem_budget):
    # tk: multiples of 128 that divide the 128-padded hidden dim (no over-padding).
    tk_cands = sorted(
        (d for d in range(128, hid_p + 1, 128)
         if hid_p % d == 0 and d <= max(128, tk_req)),
        reverse=True,
    )

    def footprint(tm_, tk_):
        b = 2 * tm_ * in_p * compute_itemsize        # x tile (double-buffered)
        b += 2 * in_p * tk_ * compute_itemsize       # w1 hidden tile
        b += 2 * hid_p * compute_itemsize            # b1 (full row, fetched once)
        b += 2 * tk_ * out_p * compute_itemsize      # w2 hidden tile
        b += 2 * out_p * compute_itemsize            # b2
        b += 2 * tm_ * out_p * out_itemsize          # output tile
        if use_scratch:
            b += tm_ * out_p * 4                     # f32 accumulator scratch
        return b

    # Row tile: multiple of 128, clamped to the padded row count.
    tm = max(128, min(_round_up(tm_req, 128), _round_up(M, 128)))
    # Megacore / v7x: keep >=2 blocks on the "parallel" row axis when M allows it.
    while tm > 128 and _round_up(M, tm) // tm < 2:
        tm = max(128, (tm // 2) // 128 * 128)

    ti, tk = 0, tk_cands[0]
    # Fit the VMEM budget: prefer shrinking tk (weight tile bytes) before tm (weight reuse).
    while footprint(tm, tk) > vmem_budget:
        if ti + 1 < len(tk_cands):
            ti += 1
            tk = tk_cands[ti]
        elif tm > 128:
            tm = max(128, (tm // 2) // 128 * 128)
        else:
            break
    return tm, tk, footprint(tm, tk)


def mlp_forward(x, params: PreparedMlpParams, *, tm=512, tk=512, approx_gelu=False):
    """Fused fc1 -> GELU -> (dropout p=0) -> fc2 -> (dropout p=0).

    x: (..., in_features).  Returns (..., out_features) in x.dtype.
    """
    in_f, out_f = params.in_features, params.out_features
    assert x.shape[-1] == in_f
    lead = x.shape[:-1]
    M = int(math.prod(lead))
    in_p, hid_p = params.w1.shape
    out_p = params.w2.shape[1]
    compute_dtype = params.w1.dtype
    out_dtype = x.dtype
    use_scratch = jnp.dtype(out_dtype) != jnp.dtype(jnp.float32)

    physical_vmem = _physical_vmem_bytes()
    budget = max(32 * _MIB, int(physical_vmem * 0.75))   # ~96 MiB v5e/v6e, ~48 MiB v7x
    tm, tk, fp = _select_tiles(
        M, in_p, hid_p, out_p,
        jnp.dtype(compute_dtype).itemsize, jnp.dtype(out_dtype).itemsize,
        tm, tk, use_scratch, budget)
    vmem_limit = min(int(physical_vmem * 0.9), max(fp + 8 * _MIB, 32 * _MIB))

    M_pad = _round_up(M, tm)
    x2d = x.reshape(M, in_f).astype(compute_dtype)
    if M_pad != M or in_p != in_f:
        x2d = jnp.pad(x2d, ((0, M_pad - M), (0, in_p - in_f)))

    kernel = _make_mlp_kernel(tk, not use_scratch, approx_gelu)
    scratch_shapes = [pltpu.VMEM((tm, out_p), jnp.float32)] if use_scratch else []

    grid = (M_pad // tm, hid_p // tk)
    out2d = pl.pallas_call(
        kernel,
        out_shape=jax.ShapeDtypeStruct((M_pad, out_p), out_dtype),
        grid_spec=pltpu.PrefetchScalarGridSpec(
            num_scalar_prefetch=0,
            grid=grid,
            in_specs=[
                pl.BlockSpec((tm, in_p), lambda i, k: (i, 0)),     # x rows
                pl.BlockSpec((in_p, tk), lambda i, k: (0, k)),     # w1 hidden tile
                pl.BlockSpec((1, hid_p), lambda i, k: (0, 0)),     # b1 (full, sliced in-kernel)
                pl.BlockSpec((tk, out_p), lambda i, k: (k, 0)),    # w2 hidden tile
                pl.BlockSpec((1, out_p), lambda i, k: (0, 0)),     # b2
            ],
            out_specs=pl.BlockSpec((tm, out_p), lambda i, k: (i, 0)),
            scratch_shapes=scratch_shapes,
        ),
        compiler_params=pltpu.CompilerParams(
            dimension_semantics=("parallel", "arbitrary"),
            vmem_limit_bytes=vmem_limit,
        ),
    )(x2d, params.w1, params.b1, params.w2, params.b2)

    return out2d[:M, :out_f].reshape(*lead, out_f)


def init_mlp_params(key, in_features, hidden_features, out_features, dtype=jnp.float32):
    """Deterministic init mimicking nn.Linear's kaiming-uniform / uniform bias."""
    k1, k2, k3, k4 = jax.random.split(key, 4)
    bound1 = 1.0 / math.sqrt(in_features)
    bound2 = 1.0 / math.sqrt(hidden_features)
    # Stored transposed vs. torch: (in, hidden), (hidden, out)
    w1 = jax.random.uniform(k1, (in_features, hidden_features), dtype, -bound1, bound1)
    b1 = jax.random.uniform(k2, (hidden_features,), dtype, -bound1, bound1)
    w2 = jax.random.uniform(k3, (hidden_features, out_features), dtype, -bound2, bound2)
    b2 = jax.random.uniform(k4, (out_features,), dtype, -bound2, bound2)
    return w1, b1, w2, b2


def _ref(x, w1, b1, w2, b2):
    xf, w1f, b1f, w2f, b2f = (a.astype(jnp.float32) for a in (x, w1, b1, w2, b2))
    h = jax.nn.gelu(xf @ w1f + b1f, approximate=False)
    return h @ w2f + b2f


if __name__ == "__main__":
    key = jax.random.PRNGKey(0)
    kx1, kp1, kx2, kp2 = jax.random.split(key, 4)

    # 1) Small shapes consistent with the module: batch=2, seq=8, in=32, hidden=64, out=32.
    B, N, in_f, hid, out_f = 2, 8, 32, 64, 32
    x = jax.random.normal(kx1, (B, N, in_f), dtype=jnp.float32)
    raw = init_mlp_params(kp1, in_f, hid, out_f)
    params = prepare_mlp_params(*raw)
    out = jax.block_until_ready(mlp_forward(x, params))
    assert out.shape == (B, N, out_f)
    ref = _ref(x.reshape(-1, in_f), *raw).reshape(B, N, out_f)
    assert jnp.allclose(out, ref, atol=1e-2, rtol=1e-2)

    # 2) Multi row-tile + multi hidden-step, non-512-divisible hidden (exercises tk/tm selection).
    B2, N2, in2, hid2, out2 = 2, 256, 256, 768, 384
    x2 = jax.random.normal(kx2, (B2, N2, in2), dtype=jnp.float32)
    raw2 = init_mlp_params(kp2, in2, hid2, out2)
    params2 = prepare_mlp_params(*raw2)
    o2 = jax.block_until_ready(mlp_forward(x2, params2))
    assert o2.shape == (B2, N2, out2)
    ref2 = _ref(x2.reshape(-1, in2), *raw2).reshape(B2, N2, out2)
    assert jnp.allclose(o2, ref2, atol=2e-2, rtol=2e-2)

    # 3) bf16 compute / bf16 output (exercises the f32-accumulator-scratch path).
    params_bf16 = prepare_mlp_params(*raw, compute_dtype=jnp.bfloat16)
    o3 = jax.block_until_ready(mlp_forward(x.astype(jnp.bfloat16), params_bf16))
    assert o3.shape == (B, N, out_f) and o3.dtype == jnp.bfloat16
    assert jnp.allclose(o3.astype(jnp.float32), ref, atol=6e-2, rtol=6e-2)

    print("KERNEL_OK")
</pallas_src>

<mosaic_0001>
module attributes {stable_mosaic.version = 11 : i64} {
  func.func @kernel(%arg0: i32, %arg1: i32, %arg2: memref<128x128xf32, #tpu.memory_space<vmem>>, %arg3: memref<128x128xf32, #tpu.memory_space<vmem>>, %arg4: memref<1x128xf32, #tpu.memory_space<vmem>>, %arg5: memref<128x128xf32, #tpu.memory_space<vmem>>, %arg6: memref<1x128xf32, #tpu.memory_space<vmem>>, %arg7: memref<128x128xf32, #tpu.memory_space<vmem>>) attributes {dimension_semantics = [#tpu.dimension_semantics<parallel>, #tpu.dimension_semantics<arbitrary>], iteration_bounds = array<i64: 1, 1>, scalar_prefetch = 0 : i64, scratch_operands = 0 : i64, tpu.core_type = #tpu.core_type<tc>, window_params = [{transform_indices = @transform_0, window_bounds = array<i64: 128, 128>}, {transform_indices = @transform_1, window_bounds = array<i64: 128, 128>}, {pipeline_mode = #tpu.pipeline_mode<synchronous>, transform_indices = @transform_2, window_bounds = array<i64: 1, 128>}, {transform_indices = @transform_3, window_bounds = array<i64: 128, 128>}, {pipeline_mode = #tpu.pipeline_mode<synchronous>, transform_indices = @transform_4, window_bounds = array<i64: 1, 128>}, {transform_indices = @transform_5, window_bounds = array<i64: 128, 128>}]} {
    %c0 = arith.constant 0 : index
    %c0_0 = arith.constant 0 : index
    %0 = vector.load %arg2[%c0, %c0_0] : memref<128x128xf32, #tpu.memory_space<vmem>>, vector<128x128xf32>
    %c0_1 = arith.constant 0 : index
    %c0_2 = arith.constant 0 : index
    %1 = vector.load %arg3[%c0_1, %c0_2] : memref<128x128xf32, #tpu.memory_space<vmem>>, vector<128x128xf32>
    %cst = arith.constant dense<0.000000e+00> : vector<128x128xf32>
    %2 = tpu.matmul %0, %1, %cst {dimension_numbers = #tpu.dot_dimension_numbers<[1], [0], [0], [1], [0, 0, 1, 1], [], []>} : vector<128x128xf32>, vector<128x128xf32>, vector<128x128xf32> -> vector<128x128xf32>
    %c128_i32 = arith.constant 128 : i32
    %3 = arith.muli %arg1, %c128_i32 : i32
    %4 = tpu.assume_multiple %3, 128 : i32
    %c0_3 = arith.constant 0 : index
    %5 = arith.index_cast %4 : i32 to index
    %6 = vector.load %arg4[%c0_3, %5] : memref<1x128xf32, #tpu.memory_space<vmem>>, vector<1x128xf32>
    %7 = vector.broadcast %6 : vector<1x128xf32> to vector<128x128xf32>
    %8 = arith.addf %2, %7 : vector<128x128xf32>
    %cst_4 = arith.constant 5.000000e-01 : f32
    %9 = vector.broadcast %cst_4 : f32 to vector<128x128xf32>
    %10 = arith.mulf %9, %8 : vector<128x128xf32>
    %cst_5 = arith.constant 0.707106769 : f32
    %11 = vector.broadcast %cst_5 : f32 to vector<128x128xf32>
    %12 = arith.mulf %8, %11 : vector<128x128xf32>
    %13 = math.erf %12 : vector<128x128xf32>
    %cst_6 = arith.constant 1.000000e+00 : f32
    %14 = vector.broadcast %cst_6 : f32 to vector<128x128xf32>
    %15 = arith.addf %14, %13 : vector<128x128xf32>
    %16 = arith.mulf %10, %15 : vector<128x128xf32>
    %c0_7 = arith.constant 0 : index
    %c0_8 = arith.constant 0 : index
    %17 = vector.load %arg5[%c0_7, %c0_8] : memref<128x128xf32, #tpu.memory_space<vmem>>, vector<128x128xf32>
    %cst_9 = arith.constant dense<0.000000e+00> : vector<128x128xf32>
    %18 = tpu.matmul %16, %17, %cst_9 {dimension_numbers = #tpu.dot_dimension_numbers<[1], [0], [0], [1], [0, 0, 1, 1], [], []>} : vector<128x128xf32>, vector<128x128xf32>, vector<128x128xf32> -> vector<128x128xf32>
    %c0_i32 = arith.constant 0 : i32
    %19 = arith.cmpi eq, %arg1, %c0_i32 : i32
    %20 = arith.extui %19 : i1 to i32
    %c0_i32_10 = arith.constant 0 : i32
    %21 = arith.cmpi ne, %20, %c0_i32_10 : i32
    scf.if %21 {
      %c0_15 = arith.constant 0 : index
      %c0_16 = arith.constant 0 : index
      %28 = vector.load %arg7[%c0_15, %c0_16] : memref<128x128xf32, #tpu.memory_space<vmem>>, vector<128x128xf32>
      tpu.vector_store %arg7[%c0_15, %c0_16], %18 {strides = array<i32>} : memref<128x128xf32, #tpu.memory_space<vmem>>, vector<128x128xf32>,
    } else {
    }
    %c0_i32_11 = arith.constant 0 : i32
    %22 = arith.cmpi ne, %arg1, %c0_i32_11 : i32
    %23 = arith.extui %22 : i1 to i32
    %c0_i32_12 = arith.constant 0 : i32
    %24 = arith.cmpi ne, %23, %c0_i32_12 : i32
    scf.if %24 {
      %c0_15 = arith.constant 0 : index
      %c0_16 = arith.constant 0 : index
      %28 = vector.load %arg7[%c0_15, %c0_16] : memref<128x128xf32, #tpu.memory_space<vmem>>, vector<128x128xf32>
      %29 = arith.addf %28, %18 : vector<128x128xf32>
      %c0_17 = arith.constant 0 : index
      %c0_18 = arith.constant 0 : index
      %30 = vector.load %arg7[%c0_17, %c0_18] : memref<128x128xf32, #tpu.memory_space<vmem>>, vector<128x128xf32>
      tpu.vector_store %arg7[%c0_17, %c0_18], %29 {strides = array<i32>} : memref<128x128xf32, #tpu.memory_space<vmem>>, vector<128x128xf32>,
    } else {
    }
    %c0_i32_13 = arith.constant 0 : i32
    %25 = arith.cmpi eq, %arg1, %c0_i32_13 : i32
    %26 = arith.extui %25 : i1 to i32
    %c0_i32_14 = arith.constant 0 : i32
    %27 = arith.cmpi ne, %26, %c0_i32_14 : i32
    scf.if %27 {
      %c0_15 = arith.constant 0 : index
      %c0_16 = arith.constant 0 : index
      %28 = vector.load %arg7[%c0_15, %c0_16] : memref<128x128xf32, #tpu.memory_space<vmem>>, vector<128x128xf32>
      %c0_17 = arith.constant 0 : index
      %c0_18 = arith.constant 0 : index
      %29 = vector.load %arg6[%c0_17, %c0_18] : memref<1x128xf32, #tpu.memory_space<vmem>>, vector<1x128xf32>
      %30 = vector.broadcast %29 : vector<1x128xf32> to vector<128x128xf32>
      %31 = arith.addf %28, %30 : vector<128x128xf32>
      %c0_19 = arith.constant 0 : index
      %c0_20 = arith.constant 0 : index
      %32 = vector.load %arg7[%c0_19, %c0_20] : memref<128x128xf32, #tpu.memory_space<vmem>>, vector<128x128xf32>
      tpu.vector_store %arg7[%c0_19, %c0_20], %31 {strides = array<i32>} : memref<128x128xf32, #tpu.memory_space<vmem>>, vector<128x128xf32>,
    } else {
    }
    return
  }
  func.func @transform_0(%arg0: i32, %arg1: i32) -> (i32, i32) {
    %c0_i32 = arith.constant 0 : i32
    %c0_i32_0 = arith.constant 0 : i32
    return %arg0, %c0_i32 : i32, i32
  }
  func.func @transform_1(%arg0: i32, %arg1: i32) -> (i32, i32) {
    %c0_i32 = arith.constant 0 : i32
    %c0_i32_0 = arith.constant 0 : i32
    return %c0_i32, %arg1 : i32, i32
  }
  func.func @transform_2(%arg0: i32, %arg1: i32) -> (i32, i32) {
    %c0_i32 = arith.constant 0 : i32
    %c0_i32_0 = arith.constant 0 : i32
    %c0_i32_1 = arith.constant 0 : i32
    return %c0_i32, %c0_i32_0 : i32, i32
  }
  func.func @transform_3(%arg0: i32, %arg1: i32) -> (i32, i32) {
    %c0_i32 = arith.constant 0 : i32
    %c0_i32_0 = arith.constant 0 : i32
    return %arg1, %c0_i32 : i32, i32
  }
  func.func @transform_4(%arg0: i32, %arg1: i32) -> (i32, i32) {
    %c0_i32 = arith.constant 0 : i32
    %c0_i32_0 = arith.constant 0 : i32
    %c0_i32_1 = arith.constant 0 : i32
    return %c0_i32, %c0_i32_0 : i32, i32
  }
  func.func @transform_5(%arg0: i32, %arg1: i32) -> (i32, i32) {
    %c0_i32 = arith.constant 0 : i32
    %c0_i32_0 = arith.constant 0 : i32
    return %arg0, %c0_i32 : i32, i32
  }
}

</mosaic_0001>

<llo_original>
// kernel: tpu_custom_call.1
$region0: #{tpu_custom_call.1}
  #allocation0 [shape = 'u32[]', space=smem, size = 0x4, offset = 0x4, fixed_abs, tag = 'smem constant byte address 0x4 - core index']
  #allocation1 [shape = 'u32[144,128]{1,0:T(1,128)}', space=vmem, size = 0x12000, scoped, tag = 'internal scratch']
  %s0 = inlined_call_operand.hbm [shape: f32[128,128], index: 0, kind: input, shape index: {}]
  %s1 = inlined_call_operand.hbm [shape: f32[128,128], index: 1, kind: input, shape index: {}]
  %s2 = inlined_call_operand.vmem [shape: f32[1,128], index: 2, kind: input, shape index: {}]
  %s3 = inlined_call_operand.hbm [shape: f32[128,128], index: 3, kind: input, shape index: {}]
  %s4 = inlined_call_operand.vmem [shape: f32[1,128], index: 4, kind: input, shape index: {}]
  %s5 = inlined_call_operand.hbm [shape: f32[128,128], index: 5, kind: output, shape index: {}]
  %s6 = sld [smem:[#allocation0]]
  $region54: #{tpu_custom_call.1} parent=0
    _
  %s8 = ssub.s32 1, %s6
  %s9 = scalar_select 0, %s8, %s6
  $region1: #{tpu_custom_call.1} parent=0
    #allocation2 [shape = 'u8[65536]{0}', space=vmem, size = 0x10000, scoped, tag = 'input window, operand 0, single buffered']
    #allocation3 [shape = 's32[1]{0}', space=sflag, size = 0x4, scoped, tag = 'scoped memory for tpu_custom_call.1']
    #allocation4 [shape = 's32[1]{0}', space=sflag, size = 0x4, scoped, tag = 'scoped memory for tpu_custom_call.1']
    #allocation5 [shape = 'u8[65536]{0}', space=vmem, size = 0x10000, scoped, tag = 'input window, operand 1, single buffered']
    #allocation6 [shape = 's32[1]{0}', space=sflag, size = 0x4, scoped, tag = 'scoped memory for tpu_custom_call.1']
    #allocation7 [shape = 'u8[65536]{0}', space=vmem, size = 0x10000, scoped, tag = 'input window, operand 3, single buffered']
    #allocation8 [shape = 'u8[65536]{0}', space=vmem, size = 0x10000, scoped, tag = 'output window, operand 0, single buffered']
    %10 = vsyncpa [#allocation3], 0
    %11 = vsyncpa [#allocation6], 0
    %12 = vsyncpa [#allocation4], 0
    // Predicated region
    $region2: #{tpu_custom_call.1} parent=1 // pred_check
      _
    $region3: #{tpu_custom_call.1} parent=1 // pred_check_branch
      %14 = sbr.rel (0) target = $region5
    $region4: #{tpu_custom_call.1} parent=1 // pred_region
      %s16 = ssub.s32 2048, 2048
      %17 = vsyncadd [#allocation3], %s16
      %s18 = sshll.u32 [#allocation2], 4
      %s19 = int_to_ptr.vmem [resolvable:$true] %s18
      %24 = dma.hbm_to_vmem [thread:$0]  %s0, 2048, %s19, [#allocation3], 128, 128, 8
    $region5: #{tpu_custom_call.1} parent=1 // pred_fallthru
      _
    // Predicated region
    $region6: #{tpu_custom_call.1} parent=1 // pred_check
      _
    $region7: #{tpu_custom_call.1} parent=1 // pred_check_branch
      %26 = sbr.rel (0) target = $region9
    $region8: #{tpu_custom_call.1} parent=1 // pred_region
      %s28 = ssub.s32 2048, 2048
      %29 = vsyncadd [#allocation6], %s28
      %s30 = sshll.u32 [#allocation5], 4
      %s31 = int_to_ptr.vmem [resolvable:$true] %s30
      %36 = dma.hbm_to_vmem [thread:$0]  %s1, 2048, %s31, [#allocation6], 128, 128, 8
    $region9: #{tpu_custom_call.1} parent=1 // pred_fallthru
      _
    // Predicated region
    $region10: #{tpu_custom_call.1} parent=1 // pred_check
      _
    $region11: #{tpu_custom_call.1} parent=1 // pred_check_branch
      %38 = sbr.rel (0) target = $region13
    $region12: #{tpu_custom_call.1} parent=1 // pred_region
      _
    $region13: #{tpu_custom_call.1} parent=1 // pred_fallthru
      _
    // Predicated region
    $region14: #{tpu_custom_call.1} parent=1 // pred_check
      _
    $region15: #{tpu_custom_call.1} parent=1 // pred_check_branch
      %40 = sbr.rel (0) target = $region17
    $region16: #{tpu_custom_call.1} parent=1 // pred_region
      %s42 = ssub.s32 2048, 2048
      %43 = vsyncadd [#allocation6], %s42
      %s44 = sshll.u32 [#allocation7], 4
      %s45 = int_to_ptr.vmem [resolvable:$true] %s44
      %50 = dma.hbm_to_vmem [thread:$0]  %s3, 2048, %s45, [#allocation6], 128, 128, 8
    $region17: #{tpu_custom_call.1} parent=1 // pred_fallthru
      _
    // Predicated region
    $region18: #{tpu_custom_call.1} parent=1 // pred_check
      _
    $region19: #{tpu_custom_call.1} parent=1 // pred_check_branch
      %52 = sbr.rel (0) target = $region21
    $region20: #{tpu_custom_call.1} parent=1 // pred_region
      _
    $region21: #{tpu_custom_call.1} parent=1 // pred_fallthru
      _
    // Predicated region
    $region22: #{tpu_custom_call.1} parent=1 // pred_check
      _
    $region23: #{tpu_custom_call.1} parent=1 // pred_check_branch
      %54 = sbr.rel (0) target = $region25
    $region24: #{tpu_custom_call.1} parent=1 // pred_region
      %55 = dma.done [#allocation3], 2048
    $region25: #{tpu_custom_call.1} parent=1 // pred_fallthru
      _
    // Predicated region
    $region26: #{tpu_custom_call.1} parent=1 // pred_check
      _
    $region27: #{tpu_custom_call.1} parent=1 // pred_check_branch
      %57 = sbr.rel (0) target = $region29
    $region28: #{tpu_custom_call.1} parent=1 // pred_region
      %58 = dma.done [#allocation6], 2048
    $region29: #{tpu_custom_call.1} parent=1 // pred_fallthru
      _
    // Predicated region
    $region30: #{tpu_custom_call.1} parent=1 // pred_check
      _
    $region31: #{tpu_custom_call.1} parent=1 // pred_check_branch
      %60 = sbr.rel (0) target = $region33
    $region32: #{tpu_custom_call.1} parent=1 // pred_region
      %61 = dma.done [#allocation6], 2048
    $region33: #{tpu_custom_call.1} parent=1 // pred_fallthru
      _
    %v62 = vld [vmem:[#allocation2] sm:$0xff]
    %v63 = vld [vmem:[#allocation2 + $0x8] sm:$0xff]
    %v64 = vld [vmem:[#allocation2 + $0x10] sm:$0xff]
    %v65 = vld [vmem:[#allocation2 + $0x18] sm:$0xff]
    %v66 = vld [vmem:[#allocation2 + $0x20] sm:$0xff]
    %v67 = vld [vmem:[#allocation2 + $0x28] sm:$0xff]
    %v68 = vld [vmem:[#allocation2 + $0x30] sm:$0xff]
    %v69 = vld [vmem:[#allocation2 + $0x38] sm:$0xff]
    %v70 = vld [vmem:[#allocation2 + $0x40] sm:$0xff]
    %v71 = vld [vmem:[#allocation2 + $0x48] sm:$0xff]
    %v72 = vld [vmem:[#allocation2 + $0x50] sm:$0xff]
    %v73 = vld [vmem:[#allocation2 + $0x58] sm:$0xff]
    %v74 = vld [vmem:[#allocation2 + $0x60] sm:$0xff]
    %v75 = vld [vmem:[#allocation2 + $0x68] sm:$0xff]
    %v76 = vld [vmem:[#allocation2 + $0x70] sm:$0xff]
    %v77 = vld [vmem:[#allocation2 + $0x78] sm:$0xff]
    %v78 = vld [vmem:[#allocation5] sm:$0xff]
    %v79 = vld [vmem:[#allocation5 + $0x8] sm:$0xff]
    %v80 = vld [vmem:[#allocation5 + $0x10] sm:$0xff]
    %v81 = vld [vmem:[#allocation5 + $0x18] sm:$0xff]
    %v82 = vld [vmem:[#allocation5 + $0x20] sm:$0xff]
    %v83 = vld [vmem:[#allocation5 + $0x28] sm:$0xff]
    %v84 = vld [vmem:[#allocation5 + $0x30] sm:$0xff]
    %v85 = vld [vmem:[#allocation5 + $0x38] sm:$0xff]
    %v86 = vld [vmem:[#allocation5 + $0x40] sm:$0xff]
    %v87 = vld [vmem:[#allocation5 + $0x48] sm:$0xff]
    %v88 = vld [vmem:[#allocation5 + $0x50] sm:$0xff]
    %v89 = vld [vmem:[#allocation5 + $0x58] sm:$0xff]
    %v90 = vld [vmem:[#allocation5 + $0x60] sm:$0xff]
    %v91 = vld [vmem:[#allocation5 + $0x68] sm:$0xff]
    %v92 = vld [vmem:[#allocation5 + $0x70] sm:$0xff]
    %v93 = vld [vmem:[#allocation5 + $0x78] sm:$0xff]
    %s94 = smul.u32 0, 128
    %s95 = sshra.s32 %s94, 7
    %s96 = sand.u32 %s94, 127
    %s97 = scalar_lea.vmem %s2, %s95
    %v98 = vld [vmem:[%s97] sm:$0x1]
    %v100 = vlaneseq
    %v101 = vshrl.u32 %v100, 7
    %v102 = vsub.s32 0, %v101
    %v103 = vrot.slane %v98, %v102
    %105 = vmatprep.subr.mxu0 0.0
    %106 = vmatpush1.msra.mxu0 %v78
    %107 = vmatprep.subr.mxu0 0.0
    %108 = vmatpush1.msra.mxu0 %v79
    %109 = vmatprep.subr.mxu0 0.0
    %110 = vmatpush1.msra.mxu0 %v80
    %111 = vmatprep.subr.mxu0 0.0
    %112 = vmatpush1.msra.mxu0 %v81
    %113 = vmatprep.subr.mxu0 0.0
    %114 = vmatpush1.msra.mxu0 %v82
    %115 = vmatprep.subr.mxu0 0.0
    %116 = vmatpush1.msra.mxu0 %v83
    %117 = vmatprep.subr.mxu0 0.0
    %118 = vmatpush1.msra.mxu0 %v84
    %119 = vmatprep.subr.mxu0 0.0
    %120 = vmatpush1.msra.mxu0 %v85
    %121 = vmatprep.subr.mxu0 0.0
    %122 = vmatpush1.msra.mxu0 %v86
    %123 = vmatprep.subr.mxu0 0.0
    %124 = vmatpush1.msra.mxu0 %v87
    %125 = vmatprep.subr.mxu0 0.0
    %126 = vmatpush1.msra.mxu0 %v88
    %127 = vmatprep.subr.mxu0 0.0
    %128 = vmatpush1.msra.mxu0 %v89
    %129 = vmatprep.subr.mxu0 0.0
    %130 = vmatpush1.msra.mxu0 %v90
    %131 = vmatprep.subr.mxu0 0.0
    %132 = vmatpush1.msra.mxu0 %v91
    %133 = vmatprep.subr.mxu0 0.0
    %134 = vmatpush1.msra.mxu0 %v92
    %135 = vmatprep.subr.mxu0 0.0
    %136 = vmatpush1.msra.mxu0 %v93
    %137 = vmatprep.subr.mxu0 0.0
    %138 = vmatpush1.msra.mxu0 0.0
    %139 = vmatprep.subr.mxu0 0.0
    %140 = vmatpush1.msra.mxu0 0.0
    %141 = vmatprep.subr.mxu0 0.0
    %142 = vmatpush1.msra.mxu0 0.0
    %143 = vmatprep.subr.mxu0 0.0
    %144 = vmatpush1.msra.mxu0 0.0
    %145 = vmatprep.subr.mxu0 0.0
    %146 = vmatpush1.msra.mxu0 0.0
    %147 = vmatprep.subr.mxu0 0.0
    %148 = vmatpush1.msra.mxu0 0.0
    %149 = vmatprep.subr.mxu0 0.0
    %150 = vmatpush1.msra.mxu0 0.0
    %151 = vmatprep.subr.mxu0 0.0
    %152 = vmatpush1.msra.mxu0 0.0
    %153 = vmatprep.subr.mxu0 0.0
    %154 = vmatpush1.msra.mxu0 0.0
    %155 = vmatprep.subr.mxu0 0.0
    %156 = vmatpush1.msra.mxu0 0.0
    %157 = vmatprep.subr.mxu0 0.0
    %158 = vmatpush1.msra.mxu0 0.0
    %159 = vmatprep.subr.mxu0 0.0
    %160 = vmatpush1.msra.mxu0 0.0
    %161 = vmatprep.subr.mxu0 0.0
    %162 = vmatpush1.msra.mxu0 0.0
    %163 = vmatprep.subr.mxu0 0.0
    %164 = vmatpush1.msra.mxu0 0.0
    %165 = vmatprep.subr.mxu0 0.0
    %166 = vmatpush1.msra.mxu0 0.0
    %167 = vmatprep.subr.mxu0 0.0
    %168 = vmatpush1.msra.mxu0 0.0
    %169 = vmatprep.mubr.f32.mxu0 0.0
    %170 = vmatmul.mubr.f32.gmra.mrb[0].mxu0 %v62
    %v171 = vpop.f32.mrb[0].mxu0
    %v172 = vadd.f32 %v103, %v171
    %v173 = vpop.f32.mrb[0].mxu0
    %174 = vmatprep.mubr.f32.mxu0 0.0
    %175 = vmatmul.mubr.f32.gmra.mrb[0].mxu0 %v63
    %v176 = vpop.f32.mrb[0].mxu0
    %v177 = vadd.f32 %v103, %v176
    %v178 = vpop.f32.mrb[0].mxu0
    %179 = vmatprep.mubr.f32.mxu0 0.0
    %180 = vmatmul.mubr.f32.gmra.mrb[0].mxu0 %v64
    %v181 = vpop.f32.mrb[0].mxu0
    %v182 = vadd.f32 %v103, %v181
    %v183 = vpop.f32.mrb[0].mxu0
    %184 = vmatprep.mubr.f32.mxu0 0.0
    %185 = vmatmul.mubr.f32.gmra.mrb[0].mxu0 %v65
    %v186 = vpop.f32.mrb[0].mxu0
    %v187 = vadd.f32 %v103, %v186
    %v188 = vpop.f32.mrb[0].mxu0
    %189 = vmatprep.mubr.f32.mxu0 0.0
    %190 = vmatmul.mubr.f32.gmra.mrb[0].mxu0 %v66
    %v191 = vpop.f32.mrb[0].mxu0
    %v192 = vadd.f32 %v103, %v191
    %v193 = vpop.f32.mrb[0].mxu0
    %194 = vmatprep.mubr.f32.mxu0 0.0
    %195 = vmatmul.mubr.f32.gmra.mrb[0].mxu0 %v67
    %v196 = vpop.f32.mrb[0].mxu0
    %v197 = vadd.f32 %v103, %v196
    %v198 = vpop.f32.mrb[0].mxu0
    %199 = vmatprep.mubr.f32.mxu0 0.0
    %200 = vmatmul.mubr.f32.gmra.mrb[0].mxu0 %v68
    %v201 = vpop.f32.mrb[0].mxu0
    %v202 = vadd.f32 %v103, %v201
    %v203 = vpop.f32.mrb[0].mxu0
    %204 = vmatprep.mubr.f32.mxu0 0.0
    %205 = vmatmul.mubr.f32.gmra.mrb[0].mxu0 %v69
    %v206 = vpop.f32.mrb[0].mxu0
    %v207 = vadd.f32 %v103, %v206
    %v208 = vpop.f32.mrb[0].mxu0
    %209 = vmatprep.mubr.f32.mxu0 0.0
    %210 = vmatmul.mubr.f32.gmra.mrb[0].mxu0 %v70
    %v211 = vpop.f32.mrb[0].mxu0
    %v212 = vadd.f32 %v103, %v211
    %v213 = vpop.f32.mrb[0].mxu0
    %214 = vmatprep.mubr.f32.mxu0 0.0
    %215 = vmatmul.mubr.f32.gmra.mrb[0].mxu0 %v71
    %v216 = vpop.f32.mrb[0].mxu0
    %v217 = vadd.f32 %v103, %v216
    %v218 = vpop.f32.mrb[0].mxu0
    %219 = vmatprep.mubr.f32.mxu0 0.0
    %220 = vmatmul.mubr.f32.gmra.mrb[0].mxu0 %v72
    %v221 = vpop.f32.mrb[0].mxu0
    %v222 = vadd.f32 %v103, %v221
    %v223 = vpop.f32.mrb[0].mxu0
    %224 = vmatprep.mubr.f32.mxu0 0.0
    %225 = vmatmul.mubr.f32.gmra.mrb[0].mxu0 %v73
    %v226 = vpop.f32.mrb[0].mxu0
    %v227 = vadd.f32 %v103, %v226
    %v228 = vpop.f32.mrb[0].mxu0
    %229 = vmatprep.mubr.f32.mxu0 0.0
    %230 = vmatmul.mubr.f32.gmra.mrb[0].mxu0 %v74
    %v231 = vpop.f32.mrb[0].mxu0
    %v232 = vadd.f32 %v103, %v231
    %v233 = vpop.f32.mrb[0].mxu0
    %234 = vmatprep.mubr.f32.mxu0 0.0
    %235 = vmatmul.mubr.f32.gmra.mrb[0].mxu0 %v75
    %v236 = vpop.f32.mrb[0].mxu0
    %v237 = vadd.f32 %v103, %v236
    %v238 = vpop.f32.mrb[0].mxu0
    %239 = vmatprep.mubr.f32.mxu0 0.0
    %240 = vmatmul.mubr.f32.gmra.mrb[0].mxu0 %v76
    %v241 = vpop.f32.mrb[0].mxu0
    %v242 = vadd.f32 %v103, %v241
    %v243 = vpop.f32.mrb[0].mxu0
    %244 = vmatprep.mubr.f32.mxu0 0.0
    %245 = vmatmul.mubr.f32.gmra.mrb[0].mxu0 %v77
    %v246 = vpop.f32.mrb[0].mxu0
    %v247 = vadd.f32 %v103, %v246
    %v248 = vpop.f32.mrb[0].mxu0
    %249 = vdwg.mxu0
    %v250 = vmul.f32 %v172, 0.5
    %v251 = vmul.f32 %v177, 0.5
    %v252 = vmul.f32 %v182, 0.5
    %v253 = vmul.f32 %v187, 0.5
    %v254 = vmul.f32 %v192, 0.5
    %v255 = vmul.f32 %v197, 0.5
    %v256 = vmul.f32 %v202, 0.5
    %v257 = vmul.f32 %v207, 0.5
    %v258 = vmul.f32 %v212, 0.5
    %v259 = vmul.f32 %v217, 0.5
    %v260 = vmul.f32 %v222, 0.5
    %v261 = vmul.f32 %v227, 0.5
    %v262 = vmul.f32 %v232, 0.5
    %v263 = vmul.f32 %v237, 0.5
    %v264 = vmul.f32 %v242, 0.5
    %v265 = vmul.f32 %v247, 0.5
    %v266 = vmul.f32 %v172, 0.70710677
    %v267 = vmul.f32 %v177, 0.70710677
    %v268 = vmul.f32 %v182, 0.70710677
    %v269 = vmul.f32 %v187, 0.70710677
    %v270 = vmul.f32 %v192, 0.70710677
    %v271 = vmul.f32 %v197, 0.70710677
    %v272 = vmul.f32 %v202, 0.70710677
    %v273 = vmul.f32 %v207, 0.70710677
    %v274 = vmul.f32 %v212, 0.70710677
    %v275 = vmul.f32 %v217, 0.70710677
    %v276 = vmul.f32 %v222, 0.70710677
    %v277 = vmul.f32 %v227, 0.70710677
    %v278 = vmul.f32 %v232, 0.70710677
    %v279 = vmul.f32 %v237, 0.70710677
    %v280 = vmul.f32 %v242, 0.70710677
    %v281 = vmul.f32 %v247, 0.70710677
    %v282 = verf.f32.pop %v266
    %v283 = verf.f32.pop %v267
    %v284 = verf.f32.pop %v268
    %v285 = verf.f32.pop %v269
    %v286 = verf.f32.pop %v270
    %v287 = verf.f32.pop %v271
    %v288 = verf.f32.pop %v272
    %v289 = verf.f32.pop %v273
    %v290 = verf.f32.pop %v274
    %v291 = verf.f32.pop %v275
    %v292 = verf.f32.pop %v276
    %v293 = verf.f32.pop %v277
    %v294 = verf.f32.pop %v278
    %v295 = verf.f32.pop %v279
    %v296 = verf.f32.pop %v280
    %v297 = verf.f32.pop %v281
    %v298 = vadd.f32 %v282, 1.0
    %v299 = vadd.f32 %v283, 1.0
    %v300 = vadd.f32 %v284, 1.0
    %v301 = vadd.f32 %v285, 1.0
    %v302 = vadd.f32 %v286, 1.0
    %v303 = vadd.f32 %v287, 1.0
    %v304 = vadd.f32 %v288, 1.0
    %v305 = vadd.f32 %v289, 1.0
    %v306 = vadd.f32 %v290, 1.0
    %v307 = vadd.f32 %v291, 1.0
    %v308 = vadd.f32 %v292, 1.0
    %v309 = vadd.f32 %v293, 1.0
    %v310 = vadd.f32 %v294, 1.0
    %v311 = vadd.f32 %v295, 1.0
    %v312 = vadd.f32 %v296, 1.0
    %v313 = vadd.f32 %v297, 1.0
    %v314 = vmul.f32 %v250, %v298
    %v315 = vmul.f32 %v251, %v299
    %v316 = vmul.f32 %v252, %v300
    %v317 = vmul.f32 %v253, %v301
    %v318 = vmul.f32 %v254, %v302
    %v319 = vmul.f32 %v255, %v303
    %v320 = vmul.f32 %v256, %v304
    %v321 = vmul.f32 %v257, %v305
    %v322 = vmul.f32 %v258, %v306
    %v323 = vmul.f32 %v259, %v307
    %v324 = vmul.f32 %v260, %v308
    %v325 = vmul.f32 %v261, %v309
    %v326 = vmul.f32 %v262, %v310
    %v327 = vmul.f32 %v263, %v311
    %v328 = vmul.f32 %v264, %v312
    %v329 = vmul.f32 %v265, %v313
    %v330 = vld [vmem:[#allocation7] sm:$0xff]
    %v331 = vld [vmem:[#allocation7 + $0x8] sm:$0xff]
    %v332 = vld [vmem:[#allocation7 + $0x10] sm:$0xff]
    %v333 = vld [vmem:[#allocation7 + $0x18] sm:$0xff]
    %v334 = vld [vmem:[#allocation7 + $0x20] sm:$0xff]
    %v335 = vld [vmem:[#allocation7 + $0x28] sm:$0xff]
    %v336 = vld [vmem:[#allocation7 + $0x30] sm:$0xff]
    %v337 = vld [vmem:[#allocation7 + $0x38] sm:$0xff]
    %v338 = vld [vmem:[#allocation7 + $0x40] sm:$0xff]
    %v339 = vld [vmem:[#allocation7 + $0x48] sm:$0xff]
    %v340 = vld [vmem:[#allocation7 + $0x50] sm:$0xff]
    %v341 = vld [vmem:[#allocation7 + $0x58] sm:$0xff]
    %v342 = vld [vmem:[#allocation7 + $0x60] sm:$0xff]
    %v343 = vld [vmem:[#allocation7 + $0x68] sm:$0xff]
    %v344 = vld [vmem:[#allocation7 + $0x70] sm:$0xff]
    %v345 = vld [vmem:[#allocation7 + $0x78] sm:$0xff]
    %346 = vmatprep.subr.mxu0 0.0
    %347 = vmatpush1.msra.mxu0 %v330
    %348 = vmatprep.subr.mxu0 0.0
    %349 = vmatpush1.msra.mxu0 %v331
    %350 = vmatprep.subr.mxu0 0.0
    %351 = vmatpush1.msra.mxu0 %v332
    %352 = vmatprep.subr.mxu0 0.0
    %353 = vmatpush1.msra.mxu0 %v333
    %354 = vmatprep.subr.mxu0 0.0
    %355 = vmatpush1.msra.mxu0 %v334
    %356 = vmatprep.subr.mxu0 0.0
    %357 = vmatpush1.msra.mxu0 %v335
    %358 = vmatprep.subr.mxu0 0.0
    %359 = vmatpush1.msra.mxu0 %v336
    %360 = vmatprep.subr.mxu0 0.0
    %361 = vmatpush1.msra.mxu0 %v337
    %362 = vmatprep.subr.mxu0 0.0
    %363 = vmatpush1.msra.mxu0 %v338
    %364 = vmatprep.subr.mxu0 0.0
    %365 = vmatpush1.msra.mxu0 %v339
    %366 = vmatprep.subr.mxu0 0.0
    %367 = vmatpush1.msra.mxu0 %v340
    %368 = vmatprep.subr.mxu0 0.0
    %369 = vmatpush1.msra.mxu0 %v341
    %370 = vmatprep.subr.mxu0 0.0
    %371 = vmatpush1.msra.mxu0 %v342
    %372 = vmatprep.subr.mxu0 0.0
    %373 = vmatpush1.msra.mxu0 %v343
    %374 = vmatprep.subr.mxu0 0.0
    %375 = vmatpush1.msra.mxu0 %v344
    %376 = vmatprep.subr.mxu0 0.0
    %377 = vmatpush1.msra.mxu0 %v345
    %378 = vmatprep.subr.mxu0 0.0
    %379 = vmatpush1.msra.mxu0 0.0
    %380 = vmatprep.subr.mxu0 0.0
    %381 = vmatpush1.msra.mxu0 0.0
    %382 = vmatprep.subr.mxu0 0.0
    %383 = vmatpush1.msra.mxu0 0.0
    %384 = vmatprep.subr.mxu0 0.0
    %385 = vmatpush1.msra.mxu0 0.0
    %386 = vmatprep.subr.mxu0 0.0
    %387 = vmatpush1.msra.mxu0 0.0
    %388 = vmatprep.subr.mxu0 0.0
    %389 = vmatpush1.msra.mxu0 0.0
    %390 = vmatprep.subr.mxu0 0.0
    %391 = vmatpush1.msra.mxu0 0.0
    %392 = vmatprep.subr.mxu0 0.0
    %393 = vmatpush1.msra.mxu0 0.0
    %394 = vmatprep.subr.mxu0 0.0
    %395 = vmatpush1.msra.mxu0 0.0
    %396 = vmatprep.subr.mxu0 0.0
    %397 = vmatpush1.msra.mxu0 0.0
    %398 = vmatprep.subr.mxu0 0.0
    %399 = vmatpush1.msra.mxu0 0.0
    %400 = vmatprep.subr.mxu0 0.0
    %401 = vmatpush1.msra.mxu0 0.0
    %402 = vmatprep.subr.mxu0 0.0
    %403 = vmatpush1.msra.mxu0 0.0
    %404 = vmatprep.subr.mxu0 0.0
    %405 = vmatpush1.msra.mxu0 0.0
    %406 = vmatprep.subr.mxu0 0.0
    %407 = vmatpush1.msra.mxu0 0.0
    %408 = vmatprep.subr.mxu0 0.0
    %409 = vmatpush1.msra.mxu0 0.0
    %410 = vmatprep.mubr.f32.mxu0 0.0
    %411 = vmatmul.mubr.f32.gmra.mrb[0].mxu0 %v314
    %v412 = vpop.f32.mrb[0].mxu0
    %v413 = vadd.f32 0.0, %v412
    %v414 = vpop.f32.mrb[0].mxu0
    %415 = vmatprep.mubr.f32.mxu0 0.0
    %416 = vmatmul.mubr.f32.gmra.mrb[0].mxu0 %v315
    %v417 = vpop.f32.mrb[0].mxu0
    %v418 = vadd.f32 0.0, %v417
    %v419 = vpop.f32.mrb[0].mxu0
    %420 = vmatprep.mubr.f32.mxu0 0.0
    %421 = vmatmul.mubr.f32.gmra.mrb[0].mxu0 %v316
    %v422 = vpop.f32.mrb[0].mxu0
    %v423 = vadd.f32 0.0, %v422
    %v424 = vpop.f32.mrb[0].mxu0
    %425 = vmatprep.mubr.f32.mxu0 0.0
    %426 = vmatmul.mubr.f32.gmra.mrb[0].mxu0 %v317
    %v427 = vpop.f32.mrb[0].mxu0
    %v428 = vadd.f32 0.0, %v427
    %v429 = vpop.f32.mrb[0].mxu0
    %430 = vmatprep.mubr.f32.mxu0 0.0
    %431 = vmatmul.mubr.f32.gmra.mrb[0].mxu0 %v318
    %v432 = vpop.f32.mrb[0].mxu0
    %v433 = vadd.f32 0.0, %v432
    %v434 = vpop.f32.mrb[0].mxu0
    %435 = vmatprep.mubr.f32.mxu0 0.0
    %436 = vmatmul.mubr.f32.gmra.mrb[0].mxu0 %v319
    %v437 = vpop.f32.mrb[0].mxu0
    %v438 = vadd.f32 0.0, %v437
    %v439 = vpop.f32.mrb[0].mxu0
    %440 = vmatprep.mubr.f32.mxu0 0.0
    %441 = vmatmul.mubr.f32.gmra.mrb[0].mxu0 %v320
    %v442 = vpop.f32.mrb[0].mxu0
    %v443 = vadd.f32 0.0, %v442
    %v444 = vpop.f32.mrb[0].mxu0
    %445 = vmatprep.mubr.f32.mxu0 0.0
    %446 = vmatmul.mubr.f32.gmra.mrb[0].mxu0 %v321
    %v447 = vpop.f32.mrb[0].mxu0
    %v448 = vadd.f32 0.0, %v447
    %v449 = vpop.f32.mrb[0].mxu0
    %450 = vmatprep.mubr.f32.mxu0 0.0
    %451 = vmatmul.mubr.f32.gmra.mrb[0].mxu0 %v322
    %v452 = vpop.f32.mrb[0].mxu0
    %v453 = vadd.f32 0.0, %v452
    %v454 = vpop.f32.mrb[0].mxu0
    %455 = vmatprep.mubr.f32.mxu0 0.0
    %456 = vmatmul.mubr.f32.gmra.mrb[0].mxu0 %v323
    %v457 = vpop.f32.mrb[0].mxu0
    %v458 = vadd.f32 0.0, %v457
    %v459 = vpop.f32.mrb[0].mxu0
    %460 = vmatprep.mubr.f32.mxu0 0.0
    %461 = vmatmul.mubr.f32.gmra.mrb[0].mxu0 %v324
    %v462 = vpop.f32.mrb[0].mxu0
    %v463 = vadd.f32 0.0, %v462
    %v464 = vpop.f32.mrb[0].mxu0
    %465 = vmatprep.mubr.f32.mxu0 0.0
    %466 = vmatmul.mubr.f32.gmra.mrb[0].mxu0 %v325
    %v467 = vpop.f32.mrb[0].mxu0
    %v468 = vadd.f32 0.0, %v467
    %v469 = vpop.f32.mrb[0].mxu0
    %470 = vmatprep.mubr.f32.mxu0 0.0
    %471 = vmatmul.mubr.f32.gmra.mrb[0].mxu0 %v326
    %v472 = vpop.f32.mrb[0].mxu0
    %v473 = vadd.f32 0.0, %v472
    %v474 = vpop.f32.mrb[0].mxu0
    %475 = vmatprep.mubr.f32.mxu0 0.0
    %476 = vmatmul.mubr.f32.gmra.mrb[0].mxu0 %v327
    %v477 = vpop.f32.mrb[0].mxu0
    %v478 = vadd.f32 0.0, %v477
    %v479 = vpop.f32.mrb[0].mxu0
    %480 = vmatprep.mubr.f32.mxu0 0.0
    %481 = vmatmul.mubr.f32.gmra.mrb[0].mxu0 %v328
    %v482 = vpop.f32.mrb[0].mxu0
    %v483 = vadd.f32 0.0, %v482
    %v484 = vpop.f32.mrb[0].mxu0
    %485 = vmatprep.mubr.f32.mxu0 0.0
    %486 = vmatmul.mubr.f32.gmra.mrb[0].mxu0 %v329
    %v487 = vpop.f32.mrb[0].mxu0
    %v488 = vadd.f32 0.0, %v487
    %v489 = vpop.f32.mrb[0].mxu0
    %490 = vdwg.mxu0
    %p491 = scmp.eq.s32.totalorder 0, 0
    // Predicated region
    $region34: #{tpu_custom_call.1} parent=1 // pred_check
      %p492 = pneg %p491
    $region35: #{tpu_custom_call.1} parent=1 // pred_check_branch
      %494 = sbr.rel (%p492) target = $region37
    $region36: #{tpu_custom_call.1} parent=1 // pred_region
      %495 = vst [vmem:[#allocation8] sm:$0xff] %v413
      %496 = vst [vmem:[#allocation8 + $0x8] sm:$0xff] %v418
      %497 = vst [vmem:[#allocation8 + $0x10] sm:$0xff] %v423
      %498 = vst [vmem:[#allocation8 + $0x18] sm:$0xff] %v428
      %499 = vst [vmem:[#allocation8 + $0x20] sm:$0xff] %v433
      %500 = vst [vmem:[#allocation8 + $0x28] sm:$0xff] %v438
      %501 = vst [vmem:[#allocation8 + $0x30] sm:$0xff] %v443
      %502 = vst [vmem:[#allocation8 + $0x38] sm:$0xff] %v448
      %503 = vst [vmem:[#allocation8 + $0x40] sm:$0xff] %v453
      %504 = vst [vmem:[#allocation8 + $0x48] sm:$0xff] %v458
      %505 = vst [vmem:[#allocation8 + $0x50] sm:$0xff] %v463
      %506 = vst [vmem:[#allocation8 + $0x58] sm:$0xff] %v468
      %507 = vst [vmem:[#allocation8 + $0x60] sm:$0xff] %v473
      %508 = vst [vmem:[#allocation8 + $0x68] sm:$0xff] %v478
      %509 = vst [vmem:[#allocation8 + $0x70] sm:$0xff] %v483
      %510 = vst [vmem:[#allocation8 + $0x78] sm:$0xff] %v488
    $region37: #{tpu_custom_call.1} parent=1 // pred_fallthru
      _
    %p511 = scmp.ne.s32.totalorder 0, 0
    // Predicated region
    $region38: #{tpu_custom_call.1} parent=1 // pred_check
      %p512 = pneg %p511
    $region39: #{tpu_custom_call.1} parent=1 // pred_check_branch
      %514 = sbr.rel (%p512) target = $region41
    $region40: #{tpu_custom_call.1} parent=1 // pred_region
      %v515 = vld [vmem:[#allocation8] sm:$0xff]
      %v516 = vld [vmem:[#allocation8 + $0x8] sm:$0xff]
      %v517 = vld [vmem:[#allocation8 + $0x10] sm:$0xff]
      %v518 = vld [vmem:[#allocation8 + $0x18] sm:$0xff]
      %v519 = vld [vmem:[#allocation8 + $0x20] sm:$0xff]
      %v520 = vld [vmem:[#allocation8 + $0x28] sm:$0xff]
      %v521 = vld [vmem:[#allocation8 + $0x30] sm:$0xff]
      %v522 = vld [vmem:[#allocation8 + $0x38] sm:$0xff]
      %v523 = vld [vmem:[#allocation8 + $0x40] sm:$0xff]
      %v524 = vld [vmem:[#allocation8 + $0x48] sm:$0xff]
      %v525 = vld [vmem:[#allocation8 + $0x50] sm:$0xff]
      %v526 = vld [vmem:[#allocation8 + $0x58] sm:$0xff]
      %v527 = vld [vmem:[#allocation8 + $0x60] sm:$0xff]
      %v528 = vld [vmem:[#allocation8 + $0x68] sm:$0xff]
      %v529 = vld [vmem:[#allocation8 + $0x70] sm:$0xff]
      %v530 = vld [vmem:[#allocation8 + $0x78] sm:$0xff]
      %v531 = vadd.f32 %v515, %v413
      %v532 = vadd.f32 %v516, %v418
      %v533 = vadd.f32 %v517, %v423
      %v534 = vadd.f32 %v518, %v428
      %v535 = vadd.f32 %v519, %v433
      %v536 = vadd.f32 %v520, %v438
      %v537 = vadd.f32 %v521, %v443
      %v538 = vadd.f32 %v522, %v448
      %v539 = vadd.f32 %v523, %v453
      %v540 = vadd.f32 %v524, %v458
      %v541 = vadd.f32 %v525, %v463
      %v542 = vadd.f32 %v526, %v468
      %v543 = vadd.f32 %v527, %v473
      %v544 = vadd.f32 %v528, %v478
      %v545 = vadd.f32 %v529, %v483
      %v546 = vadd.f32 %v530, %v488
      %547 = vst [vmem:[#allocation8] sm:$0xff] %v531
      %548 = vst [vmem:[#allocation8 + $0x8] sm:$0xff] %v532
      %549 = vst [vmem:[#allocation8 + $0x10] sm:$0xff] %v533
      %550 = vst [vmem:[#allocation8 + $0x18] sm:$0xff] %v534
      %551 = vst [vmem:[#allocation8 + $0x20] sm:$0xff] %v535
      %552 = vst [vmem:[#allocation8 + $0x28] sm:$0xff] %v536
      %553 = vst [vmem:[#allocation8 + $0x30] sm:$0xff] %v537
      %554 = vst [vmem:[#allocation8 + $0x38] sm:$0xff] %v538
      %555 = vst [vmem:[#allocation8 + $0x40] sm:$0xff] %v539
      %556 = vst [vmem:[#allocation8 + $0x48] sm:$0xff] %v540
      %557 = vst [vmem:[#allocation8 + $0x50] sm:$0xff] %v541
      %558 = vst [vmem:[#allocation8 + $0x58] sm:$0xff] %v542
      %559 = vst [vmem:[#allocation8 + $0x60] sm:$0xff] %v543
      %560 = vst [vmem:[#allocation8 + $0x68] sm:$0xff] %v544
      %561 = vst [vmem:[#allocation8 + $0x70] sm:$0xff] %v545
      %562 = vst [vmem:[#allocation8 + $0x78] sm:$0xff] %v546
    $region41: #{tpu_custom_call.1} parent=1 // pred_fallthru
      _
    // Predicated region
    $region42: #{tpu_custom_call.1} parent=1 // pred_check
      %p563 = pneg %p491
    $region43: #{tpu_custom_call.1} parent=1 // pred_check_branch
      %565 = sbr.rel (%p563) target = $region45
    $region44: #{tpu_custom_call.1} parent=1 // pred_region
      %v566 = vld [vmem:[#allocation8] sm:$0xff]
      %v567 = vld [vmem:[#allocation8 + $0x8] sm:$0xff]
      %v568 = vld [vmem:[#allocation8 + $0x10] sm:$0xff]
      %v569 = vld [vmem:[#allocation8 + $0x18] sm:$0xff]
      %v570 = vld [vmem:[#allocation8 + $0x20] sm:$0xff]
      %v571 = vld [vmem:[#allocation8 + $0x28] sm:$0xff]
      %v572 = vld [vmem:[#allocation8 + $0x30] sm:$0xff]
      %v573 = vld [vmem:[#allocation8 + $0x38] sm:$0xff]
      %v574 = vld [vmem:[#allocation8 + $0x40] sm:$0xff]
      %v575 = vld [vmem:[#allocation8 + $0x48] sm:$0xff]
      %v576 = vld [vmem:[#allocation8 + $0x50] sm:$0xff]
      %v577 = vld [vmem:[#allocation8 + $0x58] sm:$0xff]
      %v578 = vld [vmem:[#allocation8 + $0x60] sm:$0xff]
      %v579 = vld [vmem:[#allocation8 + $0x68] sm:$0xff]
      %v580 = vld [vmem:[#allocation8 + $0x70] sm:$0xff]
      %v581 = vld [vmem:[#allocation8 + $0x78] sm:$0xff]
      %v582 = vld [vmem:[%s4] sm:$0x1]
      %v584 = vlaneseq
      %v585 = vshrl.u32 %v584, 7
      %v586 = vsub.s32 0, %v585
      %v587 = vrot.slane %v582, %v586
      %v589 = vadd.f32 %v566, %v587
      %v590 = vadd.f32 %v567, %v587
      %v591 = vadd.f32 %v568, %v587
      %v592 = vadd.f32 %v569, %v587
      %v593 = vadd.f32 %v570, %v587
      %v594 = vadd.f32 %v571, %v587
      %v595 = vadd.f32 %v572, %v587
      %v596 = vadd.f32 %v573, %v587
      %v597 = vadd.f32 %v574, %v587
      %v598 = vadd.f32 %v575, %v587
      %v599 = vadd.f32 %v576, %v587
      %v600 = vadd.f32 %v577, %v587
      %v601 = vadd.f32 %v578, %v587
      %v602 = vadd.f32 %v579, %v587
      %v603 = vadd.f32 %v580, %v587
      %v604 = vadd.f32 %v581, %v587
      %605 = vst [vmem:[#allocation8] sm:$0xff] %v589
      %606 = vst [vmem:[#allocation8 + $0x8] sm:$0xff] %v590
      %607 = vst [vmem:[#allocation8 + $0x10] sm:$0xff] %v591
      %608 = vst [vmem:[#allocation8 + $0x18] sm:$0xff] %v592
      %609 = vst [vmem:[#allocation8 + $0x20] sm:$0xff] %v593
      %610 = vst [vmem:[#allocation8 + $0x28] sm:$0xff] %v594
      %611 = vst [vmem:[#allocation8 + $0x30] sm:$0xff] %v595
      %612 = vst [vmem:[#allocation8 + $0x38] sm:$0xff] %v596
      %613 = vst [vmem:[#allocation8 + $0x40] sm:$0xff] %v597
      %614 = vst [vmem:[#allocation8 + $0x48] sm:$0xff] %v598
      %615 = vst [vmem:[#allocation8 + $0x50] sm:$0xff] %v599
      %616 = vst [vmem:[#allocation8 + $0x58] sm:$0xff] %v600
      %617 = vst [vmem:[#allocation8 + $0x60] sm:$0xff] %v601
      %618 = vst [vmem:[#allocation8 + $0x68] sm:$0xff] %v602
      %619 = vst [vmem:[#allocation8 + $0x70] sm:$0xff] %v603
      %620 = vst [vmem:[#allocation8 + $0x78] sm:$0xff] %v604
    $region45: #{tpu_custom_call.1} parent=1 // pred_fallthru
      _
    // Predicated region
    $region46: #{tpu_custom_call.1} parent=1 // pred_check
      _
    $region47: #{tpu_custom_call.1} parent=1 // pred_check_branch
      %622 = sbr.rel (0) target = $region49
    $region48: #{tpu_custom_call.1} parent=1 // pred_region
      %s624 = ssub.s32 2048, 2048
      %625 = vsyncadd [#allocation4], %s624
      %s626 = sshll.u32 [#allocation8], 4
      %s627 = int_to_ptr.vmem [resolvable:$true] %s626
      %632 = dma.vmem_to_hbm [thread:$0]  %s627, 2048, %s5, [#allocation4], 128, 128, 8
    $region49: #{tpu_custom_call.1} parent=1 // pred_fallthru
      _
    // Predicated region
    $region50: #{tpu_custom_call.1} parent=1 // pred_check
      _
    $region51: #{tpu_custom_call.1} parent=1 // pred_check_branch
      %634 = sbr.rel (0) target = $region53
    $region52: #{tpu_custom_call.1} parent=1 // pred_region
      %635 = dma.done [#allocation4], 2048
    $region53: #{tpu_custom_call.1} parent=1 // pred_fallthru
      _
    %636 = vsyncpa [#allocation3], 1
    %637 = vsyncpa [#allocation6], 1
    %638 = vsyncpa [#allocation4], 1

</llo_original>
